<compile_context>
chip_gen: v5e
topology: v5e:2x2
jax: 0.10.0
libtpu: 0.0.40
codegen_flags: <defaults>
</compile_context>

<pallas_src>
import numpy as np
import jax
import jax.numpy as jnp
from jax.experimental import pallas as pl
from jax.experimental.pallas import tpu as pltpu


# ----------------------------------------------------------------------------
# Fused Pallas kernel: out = patches @ W  +  interp @ pos_table
# ----------------------------------------------------------------------------
def _embed_kernel(patches_ref, w_ref, interp_ref, pos_ref, out_ref):
    pe = jnp.dot(patches_ref[0], w_ref[...], preferred_element_type=jnp.float32)
    pp = jnp.dot(interp_ref[0], pos_ref[...], preferred_element_type=jnp.float32)
    out_ref[0] = (pe + pp).astype(out_ref.dtype)


def _sublane(dtype):
    # dtype-aware sublane packing granularity: f32 -> 8, bf16 -> 16, int8/fp8 -> 32
    return {4: 8, 2: 16, 1: 32}.get(jnp.dtype(dtype).itemsize, 8)


def _pick_row_tile(n, per_row_bytes, resident_bytes, sublane, budget=16 << 20):
    """Largest row tile that divides n, is a multiple of the sublane granularity
    and keeps the (double-buffered) working set under `budget` bytes."""
    if n % sublane != 0:
        return n                                   # small/ragged: one full block
    avail = max(budget - resident_bytes, per_row_bytes * sublane)
    best = sublane
    t = sublane
    while t <= n:
        if n % t == 0 and t * per_row_bytes <= avail:
            best = t
        t += sublane
    return best


def _fused_patch_pos_embed(patches, w2d, interp, pos_patch):
    """patches:(B,N,K)  w2d:(K,D)  interp:(B,N,N0)  pos_patch:(N0,D) -> (B,N,D)."""
    B, N, K = patches.shape
    N0, D = pos_patch.shape
    dtype = patches.dtype
    isz = jnp.dtype(dtype).itemsize

    resident = 2 * (K * D + N0 * D) * isz           # weight + pos table (dbl-buffered)
    per_row = 2 * (K + N0 + D) * isz                # patches + interp + out rows (dbl-buffered)
    tn = _pick_row_tile(N, per_row, resident, _sublane(dtype))
    grid = (B, pl.cdiv(N, tn))

    return pl.pallas_call(
        _embed_kernel,
        out_shape=jax.ShapeDtypeStruct((B, N, D), dtype),
        grid_spec=pltpu.PrefetchScalarGridSpec(
            num_scalar_prefetch=0,
            grid=grid,
            in_specs=[
                pl.BlockSpec((1, tn, K), lambda b, i: (b, i, 0)),   # patches row slab
                pl.BlockSpec((K, D), lambda b, i: (0, 0)),          # conv weight (resident)
                pl.BlockSpec((1, tn, N0), lambda b, i: (b, i, 0)),  # pos-resample matrix rows
                pl.BlockSpec((N0, D), lambda b, i: (0, 0)),         # pos table (resident)
            ],
            out_specs=pl.BlockSpec((1, tn, D), lambda b, i: (b, i, 0)),  # lane-dense full-D
        ),
        compiler_params=pltpu.CompilerParams(
            dimension_semantics=("parallel", "parallel"),
            vmem_limit_bytes=32 << 20,   # safe on v5e (16 MiB default) and within v7x 64 MiB physical
        ),
    )(patches, w2d, interp, pos_patch)


# ----------------------------------------------------------------------------
# Host-side (trace-time) bicubic resampling matrices — exact PyTorch semantics
# (cubic convolution, a = -0.75, align_corners=False, border-replicated taps).
# ----------------------------------------------------------------------------
_CUBIC_A = -0.75


def _cubic_conv1(x, a=_CUBIC_A):
    return ((a + 2.0) * x - (a + 3.0)) * x * x + 1.0


def _cubic_conv2(x, a=_CUBIC_A):
    return ((a * x - 5.0 * a) * x + 8.0 * a) * x - 4.0 * a


def _bicubic_resize_matrix(out_size, in_size):
    m = np.zeros((out_size, in_size), dtype=np.float64)
    scale = in_size / out_size
    for i in range(out_size):
        src = (i + 0.5) * scale - 0.5
        x0 = int(np.floor(src))
        t = src - x0
        w = (_cubic_conv2(t + 1.0), _cubic_conv1(t),
             _cubic_conv1(1.0 - t), _cubic_conv2(2.0 - t))
        for k in range(4):
            idx = min(max(x0 - 1 + k, 0), in_size - 1)   # border replicate (as PyTorch)
            m[i, idx] += w[k]
    return m


def _position_interp_matrix(w_patch_num, h_patch_num, grid0, grid1, max_patches):
    """(max_patches, grid0*grid1) matrix: bicubic resample of the positional grid
    to (h, w), row-major flatten, zero-padded to max_patches rows."""
    h, w = int(h_patch_num), int(w_patch_num)
    a_h = _bicubic_resize_matrix(h, grid0)   # original dim0 -> h
    a_w = _bicubic_resize_matrix(w, grid1)   # original dim1 -> w
    m = np.einsum("ip,jq->ijpq", a_h, a_w).reshape(h * w, grid0 * grid1)
    out = np.zeros((max_patches, grid0 * grid1), dtype=np.float32)
    out[: h * w] = m
    return out


# ----------------------------------------------------------------------------
# Forward pass (mirrors adapt_CLIPVisionEmbeddings.forward)
# ----------------------------------------------------------------------------
def adapt_clip_vision_embeddings(pixel_values, w_patch_num, h_patch_num, params,
                                 *, patch_size, patch_num_width, patch_num_height):
    class_embedding = params["class_embedding"]       # (D,)
    conv_w = params["patch_embedding"]                # (D, C, P, P)
    pos_table = params["position_embedding"]          # (MAX_PATCHES + 1, D)

    B, C, H, W = pixel_values.shape
    P = patch_size
    D = conv_w.shape[0]
    Hp, Wp = H // P, W // P
    N = Hp * Wp
    max_patches = patch_num_width * patch_num_height
    assert N == max_patches, "conv patch grid must equal MAX_PATCHES"
    assert pos_table.shape == (max_patches + 1, D)

    # im2col for the stride==kernel conv (pure layout plumbing, stays in XLA).
    x = pixel_values.reshape(B, C, Hp, P, Wp, P)
    x = jnp.transpose(x, (0, 2, 4, 1, 3, 5))                  # (B, Hp, Wp, C, P, P)
    patches = x.reshape(B, N, C * P * P)
    w2d = conv_w.reshape(D, C * P * P).T                      # (K, D), (c,ph,pw) order matches

    # Per-image bicubic positional resample folded into a matrix (trace time:
    # w/h patch counts are Python ints).
    interp = np.stack([
        _position_interp_matrix(wn, hn, patch_num_width, patch_num_height, max_patches)
        for wn, hn in zip(w_patch_num, h_patch_num)
    ], axis=0)                                                # (B, MAX_PATCHES, MAX_PATCHES)
    interp = jnp.asarray(interp, dtype=pixel_values.dtype)
    pos_patch = pos_table[1:].astype(pixel_values.dtype)      # (MAX_PATCHES, D)
    # TODO(synk): PyTorch casts the f32 bicubic result back to the param dtype
    # before the add; for bf16 params this fused f32 path differs by one rounding.

    # Fused Pallas kernel: patch matmul + positional resample + add.
    patch_part = _fused_patch_pos_embed(patches, w2d, interp, pos_patch)   # (B, N, D)

    # Class-token row (identical for every image): class_embedding + pos_table[0].
    cls_row = (class_embedding + pos_table[0]).astype(patch_part.dtype)
    cls_row = jnp.broadcast_to(cls_row[None, None, :], (B, 1, D))
    return jnp.concatenate([cls_row, patch_part], axis=1)     # (B, 1+N, D)


if __name__ == "__main__":
    # Small config: 32x32 image, patch 8 -> 4x4 patch grid, embed_dim 128.
    B, C, IMG, P, D = 2, 3, 32, 8, 128
    GRID = IMG // P          # 4
    MAXP = GRID * GRID       # 16
    NPOS = MAXP + 1          # 17

    key = jax.random.PRNGKey(0)
    k_pix, k_cls, k_w, k_pos = jax.random.split(key, 4)
    pixel_values = jax.random.normal(k_pix, (B, C, IMG, IMG), dtype=jnp.float32)
    params = {
        "class_embedding": jax.random.normal(k_cls, (D,), dtype=jnp.float32),
        "patch_embedding": jax.random.normal(k_w, (D, C, P, P), dtype=jnp.float32) * 0.02,
        "position_embedding": jax.random.normal(k_pos, (NPOS, D), dtype=jnp.float32) * 0.02,
    }
    w_patch_num = [4, 3]
    h_patch_num = [4, 4]

    out = adapt_clip_vision_embeddings(
        pixel_values, w_patch_num, h_patch_num, params,
        patch_size=P, patch_num_width=GRID, patch_num_height=GRID)
    out = jax.block_until_ready(out)
    assert out.shape == (B, NPOS, D) and out.dtype == jnp.float32

    # Pure-JAX reference for the fused path.
    xr = pixel_values.reshape(B, C, GRID, P, GRID, P)
    xr = jnp.transpose(xr, (0, 2, 4, 1, 3, 5)).reshape(B, MAXP, C * P * P)
    w2d = params["patch_embedding"].reshape(D, C * P * P).T
    interp_ref = np.stack([
        _position_interp_matrix(wn, hn, GRID, GRID, MAXP)
        for wn, hn in zip(w_patch_num, h_patch_num)
    ])
    ref_patch = (jnp.einsum("bnk,kd->bnd", xr, w2d, preferred_element_type=jnp.float32)
                 + jnp.einsum("bnm,md->bnd", jnp.asarray(interp_ref, jnp.float32),
                              params["position_embedding"][1:],
                              preferred_element_type=jnp.float32))
    cls = (params["class_embedding"] + params["position_embedding"][0])[None, None, :]
    ref = jnp.concatenate([jnp.broadcast_to(cls, (B, 1, D)), ref_patch], axis=1)
    assert bool(jnp.allclose(out, ref, rtol=2e-2, atol=2e-2)), \
        float(jnp.abs(out - ref).max())
    print("KERNEL_OK")
</pallas_src>

<mosaic_0001>
module attributes {stable_mosaic.version = 11 : i64} {
  func.func @_embed_kernel(%arg0: i32, %arg1: i32, %arg2: memref<1x16x192xf32, #tpu.memory_space<vmem>>, %arg3: memref<192x128xf32, #tpu.memory_space<vmem>>, %arg4: memref<1x16x16xf32, #tpu.memory_space<vmem>>, %arg5: memref<16x128xf32, #tpu.memory_space<vmem>>, %arg6: memref<1x16x128xf32, #tpu.memory_space<vmem>>) attributes {dimension_semantics = [#tpu.dimension_semantics<parallel>, #tpu.dimension_semantics<parallel>], iteration_bounds = array<i64: 2, 1>, scalar_prefetch = 0 : i64, scratch_operands = 0 : i64, tpu.core_type = #tpu.core_type<tc>, window_params = [{transform_indices = @transform_0, window_bounds = array<i64: 1, 16, 192>}, {pipeline_mode = #tpu.pipeline_mode<synchronous>, transform_indices = @transform_1, window_bounds = array<i64: 192, 128>}, {transform_indices = @transform_2, window_bounds = array<i64: 1, 16, 16>}, {pipeline_mode = #tpu.pipeline_mode<synchronous>, transform_indices = @transform_3, window_bounds = array<i64: 16, 128>}, {transform_indices = @transform_4, window_bounds = array<i64: 1, 16, 128>}]} {
    %c0 = arith.constant 0 : index
    %c0_0 = arith.constant 0 : index
    %c0_1 = arith.constant 0 : index
    %0 = vector.load %arg2[%c0, %c0_0, %c0_1] : memref<1x16x192xf32, #tpu.memory_space<vmem>>, vector<1x16x192xf32>
    %1 = vector.shape_cast %0 : vector<1x16x192xf32> to vector<16x192xf32>
    %c0_2 = arith.constant 0 : index
    %c0_3 = arith.constant 0 : index
    %2 = vector.load %arg3[%c0_2, %c0_3] : memref<192x128xf32, #tpu.memory_space<vmem>>, vector<192x128xf32>
    %cst = arith.constant dense<0.000000e+00> : vector<16x128xf32>
    %3 = tpu.matmul %1, %2, %cst {dimension_numbers = #tpu.dot_dimension_numbers<[1], [0], [0], [1], [0, 0, 1, 1], [], []>} : vector<16x192xf32>, vector<192x128xf32>, vector<16x128xf32> -> vector<16x128xf32>
    %c0_4 = arith.constant 0 : index
    %c0_5 = arith.constant 0 : index
    %c0_6 = arith.constant 0 : index
    %4 = vector.load %arg4[%c0_4, %c0_5, %c0_6] : memref<1x16x16xf32, #tpu.memory_space<vmem>>, vector<1x16x16xf32>
    %5 = vector.shape_cast %4 : vector<1x16x16xf32> to vector<16x16xf32>
    %c0_7 = arith.constant 0 : index
    %c0_8 = arith.constant 0 : index
    %6 = vector.load %arg5[%c0_7, %c0_8] : memref<16x128xf32, #tpu.memory_space<vmem>>, vector<16x128xf32>
    %cst_9 = arith.constant dense<0.000000e+00> : vector<16x128xf32>
    %7 = tpu.matmul %5, %6, %cst_9 {dimension_numbers = #tpu.dot_dimension_numbers<[1], [0], [0], [1], [0, 0, 1, 1], [], []>} : vector<16x16xf32>, vector<16x128xf32>, vector<16x128xf32> -> vector<16x128xf32>
    %8 = arith.addf %3, %7 : vector<16x128xf32>
    %c0_10 = arith.constant 0 : index
    %c0_11 = arith.constant 0 : index
    %c0_12 = arith.constant 0 : index
    %9 = vector.load %arg6[%c0_10, %c0_11, %c0_12] : memref<1x16x128xf32, #tpu.memory_space<vmem>>, vector<1x16x128xf32>
    %10 = vector.shape_cast %9 : vector<1x16x128xf32> to vector<16x128xf32>
    %11 = vector.shape_cast %8 : vector<16x128xf32> to vector<1x16x128xf32>
    tpu.vector_store %arg6[%c0_10, %c0_11, %c0_12], %11 {strides = array<i32>} : memref<1x16x128xf32, #tpu.memory_space<vmem>>, vector<1x16x128xf32>,
    return
  }
  func.func @transform_0(%arg0: i32, %arg1: i32) -> (i32, i32, i32) {
    %c0_i32 = arith.constant 0 : i32
    %c0_i32_0 = arith.constant 0 : i32
    return %arg0, %arg1, %c0_i32 : i32, i32, i32
  }
  func.func @transform_1(%arg0: i32, %arg1: i32) -> (i32, i32) {
    %c0_i32 = arith.constant 0 : i32
    %c0_i32_0 = arith.constant 0 : i32
    %c0_i32_1 = arith.constant 0 : i32
    return %c0_i32, %c0_i32_0 : i32, i32
  }
  func.func @transform_2(%arg0: i32, %arg1: i32) -> (i32, i32, i32) {
    %c0_i32 = arith.constant 0 : i32
    %c0_i32_0 = arith.constant 0 : i32
    return %arg0, %arg1, %c0_i32 : i32, i32, i32
  }
  func.func @transform_3(%arg0: i32, %arg1: i32) -> (i32, i32) {
    %c0_i32 = arith.constant 0 : i32
    %c0_i32_0 = arith.constant 0 : i32
    %c0_i32_1 = arith.constant 0 : i32
    return %c0_i32, %c0_i32_0 : i32, i32
  }
  func.func @transform_4(%arg0: i32, %arg1: i32) -> (i32, i32, i32) {
    %c0_i32 = arith.constant 0 : i32
    %c0_i32_0 = arith.constant 0 : i32
    return %arg0, %arg1, %c0_i32 : i32, i32, i32
  }
}

</mosaic_0001>

<llo_original>
// kernel: tpu_custom_call.1
$region0: #{tpu_custom_call.1}
  #allocation0 [shape = 'u32[]', space=smem, size = 0x4, offset = 0x4, fixed_abs, tag = 'smem constant byte address 0x4 - core index']
  #allocation1 [shape = 'u32[72,128]{1,0:T(1,128)}', space=vmem, size = 0x9000, scoped, tag = 'internal scratch']
  %s0 = inlined_call_operand.hbm [shape: f32[2,16,192], index: 0, kind: input, shape index: {}]
  %s1 = inlined_call_operand.hbm [shape: f32[192,128], index: 1, kind: input, shape index: {}]
  %s2 = inlined_call_operand.hbm [shape: f32[2,16,16], index: 2, kind: input, shape index: {}]
  %s3 = inlined_call_operand.hbm [shape: f32[16,128], index: 3, kind: input, shape index: {}]
  %s4 = inlined_call_operand.hbm [shape: f32[2,16,128], index: 4, kind: output, shape index: {}]
  %s5 = sld [smem:[#allocation0]]
  $region65: #{tpu_custom_call.1} parent=0
    _
  %s7 = ssub.s32 1, %s5
  %s8 = scalar_select 0, %s7, %s5
  $region1: #{tpu_custom_call.1} parent=0
    #allocation2 [shape = 'u8[32768]{0}', space=vmem, size = 0x8000, scoped, tag = 'input window, operand 0']
    #allocation3 [shape = 's32[2]{0}', space=sflag, size = 0x8, scoped, tag = 'scoped memory for tpu_custom_call.1']
    #allocation4 [shape = 's32[2]{0}', space=sflag, size = 0x8, scoped, tag = 'scoped memory for tpu_custom_call.1']
    #allocation5 [shape = 'u8[98304]{0}', space=vmem, size = 0x18000, scoped, tag = 'input window, operand 1, single buffered']
    #allocation6 [shape = 's32[1]{0}', space=sflag, size = 0x4, scoped, tag = 'scoped memory for tpu_custom_call.1']
    #allocation7 [shape = 'u8[16384]{0}', space=vmem, size = 0x4000, scoped, tag = 'input window, operand 2']
    #allocation8 [shape = 'u8[8192]{0}', space=vmem, size = 0x2000, scoped, tag = 'input window, operand 3, single buffered']
    #allocation9 [shape = 'u8[16384]{0}', space=vmem, size = 0x4000, scoped, tag = 'output window, operand 0']
    %9 = vsyncpa [#allocation3], 0
    %s10 = scalar_lea.sflag [#allocation3], 1
    %11 = vsyncpa %s10, 0
    %12 = vsyncpa [#allocation6], 0
    %13 = vsyncpa [#allocation4], 0
    %s14 = scalar_lea.sflag [#allocation4], 1
    %15 = vsyncpa %s14, 0
    loop: start=0, step=1, limit=4
    $region2: #{tpu_custom_call.1} parent=1 // loop_pre_header
      _
    $region3: #{tpu_custom_call.1} parent=1 // loop_header
      %s17 = sphi 0, %s21
      %p18 = scmp.ge.s32.totalorder %s17, 4
      %s24 = sphi 0, %s36
      %s25 = sphi 0, %s32
      %s26 = sphi 0, %s24
      %s27 = sphi 0, %s25
      %s28 = sphi 0, %s26
      %s29 = sphi 0, %s27
      %s41 = sphi 0, %s43
      %s44 = sphi 0, %s41
      %s45 = sphi 0, %s44
      %s61 = sphi 0, %s45
      %s65 = sphi 0, %s65
      %s67 = sphi 0, %s65
      %s68 = sphi 0, %s67
      %s82 = sphi 0, %s68
      %s90 = sphi 0, %s92
      %s93 = sphi 0, %s90
      %s94 = sphi 0, %s93
      %s110 = sphi 0, %s94
      %s114 = sphi 0, %s114
      %s116 = sphi 0, %s114
      %s117 = sphi 0, %s116
      %s131 = sphi 0, %s117
      %s139 = sphi 0, %s141
      %s142 = sphi 0, %s139
      %s143 = sphi 0, %s142
      %s159 = sphi 0, %s143
    $region4: #{tpu_custom_call.1} parent=1 // loop_header_branch
      %20 = sbr.rel (%p18) target = $region8
    $region5: #{tpu_custom_call.1} parent=1 // loop_body
      %s22 = ssub.s32 %s17, 1
      %s23 = ssub.s32 %s17, 2
      %s30 = sadd.s32 1, %s25
      %p31 = scmp.ge.s32.totalorder %s30, 1
      %s32 = scalar_select %p31, 0, %s30
      %s33 = sadd.s32 1, %s24
      %s34 = scalar_select %p31, %s33, %s24
      %p35 = scmp.ge.s32.totalorder %s34, 2
      %s36 = scalar_select %p35, 0, %s34
      %s37 = ssub.s32 %s24, %s36
      %s38 = ssub.s32 %s25, %s32
      %s39 = sor.u32 %s37, %s38
      %p40 = scmp.eq.s32.totalorder %s39, 0
      %s42 = sadd.s32 %s41, 1
      %s43 = scalar_select %p40, %s41, %s42
      %p46 = pneg %p40
      %p47 = scmp.eq.s32.totalorder %s17, 1
      %p48 = por %p46, %p47
      %p49 = scmp.ne.s32.totalorder %s41, %s44
      %p50 = scmp.eq.s32.totalorder %s17, 0
      %p51 = por %p49, %p50
      %p52 = scmp.ne.s32.totalorder %s41, %s44
      %p53 = scmp.eq.s32.totalorder %s22, 1
      %p54 = por %p52, %p53
      %p55 = scmp.ne.s32.totalorder %s44, %s45
      %p56 = scmp.eq.s32.totalorder %s22, 0
      %p57 = por %p55, %p56
      %p58 = scmp.ne.s32.totalorder %s44, %s45
      %p59 = scmp.eq.s32.totalorder %s23, 1
      %p60 = por %p58, %p59
      %p62 = scmp.ne.s32.totalorder %s45, %s61
      %p63 = scmp.eq.s32.totalorder %s23, 0
      %p64 = por %p62, %p63
      %s66 = sadd.s32 %s65, 1
      %p69 = scmp.eq.s32.totalorder %s17, 1
      %p70 = scmp.ne.s32.totalorder %s65, %s67
      %p71 = scmp.eq.s32.totalorder %s17, 0
      %p72 = por %p70, %p71
      %p73 = scmp.ne.s32.totalorder %s65, %s67
      %p74 = scmp.eq.s32.totalorder %s22, 1
      %p75 = por %p73, %p74
      %p76 = scmp.ne.s32.totalorder %s67, %s68
      %p77 = scmp.eq.s32.totalorder %s22, 0
      %p78 = por %p76, %p77
      %p79 = scmp.ne.s32.totalorder %s67, %s68
      %p80 = scmp.eq.s32.totalorder %s23, 1
      %p81 = por %p79, %p80
      %p83 = scmp.ne.s32.totalorder %s68, %s82
      %p84 = scmp.eq.s32.totalorder %s23, 0
      %p85 = por %p83, %p84
      %s86 = ssub.s32 %s24, %s36
      %s87 = ssub.s32 %s25, %s32
      %s88 = sor.u32 %s86, %s87
      %p89 = scmp.eq.s32.totalorder %s88, 0
      %s91 = sadd.s32 %s90, 1
      %s92 = scalar_select %p89, %s90, %s91
      %p95 = pneg %p89
      %p96 = scmp.eq.s32.totalorder %s17, 1
      %p97 = por %p95, %p96
      %p98 = scmp.ne.s32.totalorder %s90, %s93
      %p99 = scmp.eq.s32.totalorder %s17, 0
      %p100 = por %p98, %p99
      %p101 = scmp.ne.s32.totalorder %s90, %s93
      %p102 = scmp.eq.s32.totalorder %s22, 1
      %p103 = por %p101, %p102
      %p104 = scmp.ne.s32.totalorder %s93, %s94
      %p105 = scmp.eq.s32.totalorder %s22, 0
      %p106 = por %p104, %p105
      %p107 = scmp.ne.s32.totalorder %s93, %s94
      %p108 = scmp.eq.s32.totalorder %s23, 1
      %p109 = por %p107, %p108
      %p111 = scmp.ne.s32.totalorder %s94, %s110
      %p112 = scmp.eq.s32.totalorder %s23, 0
      %p113 = por %p111, %p112
      %s115 = sadd.s32 %s114, 1
      %p118 = scmp.eq.s32.totalorder %s17, 1
      %p119 = scmp.ne.s32.totalorder %s114, %s116
      %p120 = scmp.eq.s32.totalorder %s17, 0
      %p121 = por %p119, %p120
      %p122 = scmp.ne.s32.totalorder %s114, %s116
      %p123 = scmp.eq.s32.totalorder %s22, 1
      %p124 = por %p122, %p123
      %p125 = scmp.ne.s32.totalorder %s116, %s117
      %p126 = scmp.eq.s32.totalorder %s22, 0
      %p127 = por %p125, %p126
      %p128 = scmp.ne.s32.totalorder %s116, %s117
      %p129 = scmp.eq.s32.totalorder %s23, 1
      %p130 = por %p128, %p129
      %p132 = scmp.ne.s32.totalorder %s117, %s131
      %p133 = scmp.eq.s32.totalorder %s23, 0
      %p134 = por %p132, %p133
      %s135 = ssub.s32 %s24, %s36
      %s136 = ssub.s32 %s25, %s32
      %s137 = sor.u32 %s135, %s136
      %p138 = scmp.eq.s32.totalorder %s137, 0
      %s140 = sadd.s32 %s139, 1
      %s141 = scalar_select %p138, %s139, %s140
      %p144 = pneg %p138
      %p145 = scmp.eq.s32.totalorder %s17, 1
      %p146 = por %p144, %p145
      %p147 = scmp.ne.s32.totalorder %s139, %s142
      %p148 = scmp.eq.s32.totalorder %s17, 0
      %p149 = por %p147, %p148
      %p150 = scmp.ne.s32.totalorder %s139, %s142
      %p151 = scmp.eq.s32.totalorder %s22, 1
      %p152 = por %p150, %p151
      %p153 = scmp.ne.s32.totalorder %s142, %s143
      %p154 = scmp.eq.s32.totalorder %s22, 0
      %p155 = por %p153, %p154
      %p156 = scmp.ne.s32.totalorder %s142, %s143
      %p157 = scmp.eq.s32.totalorder %s23, 1
      %p158 = por %p156, %p157
      %p160 = scmp.ne.s32.totalorder %s143, %s159
      %p161 = scmp.eq.s32.totalorder %s23, 0
      %p162 = por %p160, %p161
      %p163 = scmp.le.s32.totalorder 1, %s17
      %p164 = scmp.lt.s32.totalorder %s17, 3
      %p165 = pnand %p163, %p164
      %p166 = pneg %p165
      // Predicated region
      $region9: #{tpu_custom_call.1} parent=5 // pred_check
        _
      $region10: #{tpu_custom_call.1} parent=5 // pred_check_branch
        %168 = sbr.rel (%p165) target = $region12
      $region11: #{tpu_custom_call.1} parent=5 // pred_region
        %s169 = ssub.s32 %s17, 1
        // Predicated region
        $region13: #{tpu_custom_call.1} parent=11 // pred_check
          %p170 = pneg %p78
        $region14: #{tpu_custom_call.1} parent=11 // pred_check_branch
          %172 = sbr.rel (%p170) target = $region16
        $region15: #{tpu_custom_call.1} parent=11 // pred_region
          %174 = vsyncadd [#allocation6], 0
          %s175 = sshll.u32 %s1, 4
          %s176 = int_to_ptr.hbm [resolvable:$true] %s175
          %s177 = sshll.u32 [#allocation5], 4
          %s178 = int_to_ptr.vmem [resolvable:$true] %s177
          %183 = dma.hbm_to_vmem [thread:$0]  %s176, 3072, %s178, [#allocation6], 128, 128, 8
        $region16: #{tpu_custom_call.1} parent=11 // pred_fallthru
          _
        // Predicated region
        $region17: #{tpu_custom_call.1} parent=11 // pred_check
          %p184 = pneg %p127
        $region18: #{tpu_custom_call.1} parent=11 // pred_check_branch
          %186 = sbr.rel (%p184) target = $region20
        $region19: #{tpu_custom_call.1} parent=11 // pred_region
          %188 = vsyncadd [#allocation6], 0
          %s189 = sshll.u32 %s3, 4
          %s190 = int_to_ptr.hbm [resolvable:$true] %s189
          %s191 = sshll.u32 [#allocation8], 4
          %s192 = int_to_ptr.vmem [resolvable:$true] %s191
          %197 = dma.hbm_to_vmem [thread:$0]  %s190, 256, %s192, [#allocation6], 128, 128, 8
        $region20: #{tpu_custom_call.1} parent=11 // pred_fallthru
          _
      $region12: #{tpu_custom_call.1} parent=5 // pred_fallthru
        _
      %p198 = scmp.lt.s32.totalorder %s17, 2
      // Predicated region
      $region21: #{tpu_custom_call.1} parent=5 // pred_check
        %p199 = pneg %p198
      $region22: #{tpu_custom_call.1} parent=5 // pred_check_branch
        %201 = sbr.rel (%p199) target = $region24
      $region23: #{tpu_custom_call.1} parent=5 // pred_region
        // Predicated region
        $region25: #{tpu_custom_call.1} parent=23 // pred_check
          %p202 = pneg %p51
        $region26: #{tpu_custom_call.1} parent=23 // pred_check_branch
          %204 = sbr.rel (%p202) target = $region28
        $region27: #{tpu_custom_call.1} parent=23 // pred_region
          %s205 = sand.u32 %s17, 1
          %s206 = scalar_lea.sflag [#allocation3], %s205
          %s207 = sand.u32 %s41, 1
          %s208 = smul.addr %s207, 32
          %s209 = scalar_lea.vmem [#allocation2], %s208
          %s210 = smul.u32 2, %s25
          %212 = vsyncadd %s206, 0
          %s213 = smul.addr %s210, 2
          %s214 = smul.addr %s24, 4
          %s215 = sadd.s32 %s213, %s214
          %s216 = smul.addr %s215, 8
          %s217 = scalar_lea.hbm %s0, %s216
          %s218 = sshll.u32 %s217, 4
          %s219 = int_to_ptr.hbm [resolvable:$true] %s218
          %s220 = sshll.u32 %s209, 4
          %s221 = int_to_ptr.vmem [resolvable:$true] %s220
          %226 = dma.hbm_to_vmem [thread:$0]  %s219, 512, %s221, %s206, 256, 256, 16
        $region28: #{tpu_custom_call.1} parent=23 // pred_fallthru
          _
        // Predicated region
        $region29: #{tpu_custom_call.1} parent=23 // pred_check
          %p227 = pneg %p100
        $region30: #{tpu_custom_call.1} parent=23 // pred_check_branch
          %229 = sbr.rel (%p227) target = $region32
        $region31: #{tpu_custom_call.1} parent=23 // pred_region
          %s230 = sand.u32 %s17, 1
          %s231 = scalar_lea.sflag [#allocation3], %s230
          %s232 = sand.u32 %s90, 1
          %s233 = smul.addr %s232, 16
          %s234 = scalar_lea.vmem [#allocation7], %s233
          %s235 = smul.u32 2, %s25
          %237 = vsyncadd %s231, 0
          %s238 = smul.addr %s24, 2
          %s239 = sadd.s32 %s235, %s238
          %s240 = smul.addr %s239, 8
          %s241 = scalar_lea.hbm %s2, %s240
          %s242 = sshll.u32 %s241, 4
          %s243 = int_to_ptr.hbm [resolvable:$true] %s242
          %s244 = sshll.u32 %s234, 4
          %s245 = int_to_ptr.vmem [resolvable:$true] %s244
          %250 = dma.hbm_to_vmem [thread:$0]  %s243, 256, %s245, %s231, 128, 128, 8
        $region32: #{tpu_custom_call.1} parent=23 // pred_fallthru
          _
      $region24: #{tpu_custom_call.1} parent=5 // pred_fallthru
        _
      %p251 = scmp.le.s32.totalorder 1, %s17
      %p252 = scmp.lt.s32.totalorder %s17, 3
      %p253 = pnand %p251, %p252
      %p254 = pneg %p253
      // Predicated region
      $region33: #{tpu_custom_call.1} parent=5 // pred_check
        _
      $region34: #{tpu_custom_call.1} parent=5 // pred_check_branch
        %256 = sbr.rel (%p253) target = $region36
      $region35: #{tpu_custom_call.1} parent=5 // pred_region
        %s257 = ssub.s32 %s17, 1
        %s258 = sand.u32 %s22, 1
        %s259 = scalar_lea.sflag [#allocation3], %s258
        %s260 = sand.u32 %s44, 1
        %s261 = smul.addr %s260, 32
        %s262 = scalar_lea.vmem [#allocation2], %s261
        // Predicated region
        $region37: #{tpu_custom_call.1} parent=35 // pred_check
          %p263 = pneg %p57
        $region38: #{tpu_custom_call.1} parent=35 // pred_check_branch
          %265 = sbr.rel (%p263) target = $region40
        $region39: #{tpu_custom_call.1} parent=35 // pred_region
          %267 = dma.done %s259, 512
        $region40: #{tpu_custom_call.1} parent=35 // pred_fallthru
          _
        // Predicated region
        $region41: #{tpu_custom_call.1} parent=35 // pred_check
          %p268 = pneg %p78
        $region42: #{tpu_custom_call.1} parent=35 // pred_check_branch
          %270 = sbr.rel (%p268) target = $region44
        $region43: #{tpu_custom_call.1} parent=35 // pred_region
          %272 = dma.done [#allocation6], 3072
        $region44: #{tpu_custom_call.1} parent=35 // pred_fallthru
          _
        %s273 = sand.u32 %s22, 1
        %s274 = scalar_lea.sflag [#allocation3], %s273
        %s275 = sand.u32 %s93, 1
        %s276 = smul.addr %s275, 16
        %s277 = scalar_lea.vmem [#allocation7], %s276
        // Predicated region
        $region45: #{tpu_custom_call.1} parent=35 // pred_check
          %p278 = pneg %p106
        $region46: #{tpu_custom_call.1} parent=35 // pred_check_branch
          %280 = sbr.rel (%p278) target = $region48
        $region47: #{tpu_custom_call.1} parent=35 // pred_region
          %282 = dma.done %s274, 256
        $region48: #{tpu_custom_call.1} parent=35 // pred_fallthru
          _
        // Predicated region
        $region49: #{tpu_custom_call.1} parent=35 // pred_check
          %p283 = pneg %p127
        $region50: #{tpu_custom_call.1} parent=35 // pred_check_branch
          %285 = sbr.rel (%p283) target = $region52
        $region51: #{tpu_custom_call.1} parent=35 // pred_region
          %287 = dma.done [#allocation6], 256
        $region52: #{tpu_custom_call.1} parent=35 // pred_fallthru
          _
        %s288 = sand.u32 %s22, 1
        %s289 = scalar_lea.sflag [#allocation3], %s288
        %s290 = sand.u32 %s44, 1
        %s291 = smul.addr %s290, 32
        %s292 = scalar_lea.vmem [#allocation2], %s291
        %p293 = pneg %p57
        %p294 = pneg %p54
        %p295 = pneg %p78
        %p296 = pneg %p75
        %s297 = sand.u32 %s22, 1
        %s298 = scalar_lea.sflag [#allocation3], %s297
        %s299 = sand.u32 %s93, 1
        %s300 = smul.addr %s299, 16
        %s301 = scalar_lea.vmem [#allocation7], %s300
        %p302 = pneg %p106
        %p303 = pneg %p103
        %p304 = pneg %p127
        %p305 = pneg %p124
        %p306 = pneg %p155
        %p307 = pneg %p152
        %s308 = sand.u32 %s142, 1
        %s309 = scalar_lea.sflag [#allocation4], %s308
        %s310 = sand.u32 %s142, 1
        %s311 = smul.addr %s310, 16
        %s312 = scalar_lea.vmem [#allocation9], %s311
        %s313 = smul.u32 2, %s27
        %s314 = smul.u32 2, %s27
        %s315 = smul.u32 2, %s27
        %v316 = vld [vmem:[%s262] sm:$0xff]
        %v317 = vld [vmem:[%s262 + $0x8] sm:$0xff]
        %v318 = vld [vmem:[%s262 + $0x10] sm:$0xff]
        %v319 = vld [vmem:[%s262 + $0x18] sm:$0xff]
        %v320 = vld [vmem:[#allocation5] sm:$0xff]
        %v321 = vld [vmem:[#allocation5 + $0x8] sm:$0xff]
        %v322 = vld [vmem:[#allocation5 + $0x10] sm:$0xff]
        %v323 = vld [vmem:[#allocation5 + $0x18] sm:$0xff]
        %v324 = vld [vmem:[#allocation5 + $0x20] sm:$0xff]
        %v325 = vld [vmem:[#allocation5 + $0x28] sm:$0xff]
        %v326 = vld [vmem:[#allocation5 + $0x30] sm:$0xff]
        %v327 = vld [vmem:[#allocation5 + $0x38] sm:$0xff]
        %v328 = vld [vmem:[#allocation5 + $0x40] sm:$0xff]
        %v329 = vld [vmem:[#allocation5 + $0x48] sm:$0xff]
        %v330 = vld [vmem:[#allocation5 + $0x50] sm:$0xff]
        %v331 = vld [vmem:[#allocation5 + $0x58] sm:$0xff]
        %v332 = vld [vmem:[#allocation5 + $0x60] sm:$0xff]
        %v333 = vld [vmem:[#allocation5 + $0x68] sm:$0xff]
        %v334 = vld [vmem:[#allocation5 + $0x70] sm:$0xff]
        %v335 = vld [vmem:[#allocation5 + $0x78] sm:$0xff]
        %v336 = vld [vmem:[#allocation5 + $0x80] sm:$0xff]
        %v337 = vld [vmem:[#allocation5 + $0x88] sm:$0xff]
        %v338 = vld [vmem:[#allocation5 + $0x90] sm:$0xff]
        %v339 = vld [vmem:[#allocation5 + $0x98] sm:$0xff]
        %v340 = vld [vmem:[#allocation5 + $0xa0] sm:$0xff]
        %v341 = vld [vmem:[#allocation5 + $0xa8] sm:$0xff]
        %v342 = vld [vmem:[#allocation5 + $0xb0] sm:$0xff]
        %v343 = vld [vmem:[#allocation5 + $0xb8] sm:$0xff]
        %v344 = vld [vmem:[%s277] sm:$0xff]
        %v345 = vld [vmem:[%s277 + $0x8] sm:$0xff]
        %v346 = vld [vmem:[#allocation8] sm:$0xff]
        %v347 = vld [vmem:[#allocation8 + $0x8] sm:$0xff]
        %vm348 = vcmask 130048
        %v350 = vsel %vm348, %v344, 0
        %v353 = vsel %vm348, %v345, 0
        %355 = vmatpush.msra.mxu0 0.0
        %356 = vmatpush.msra.mxu0 0.0
        %357 = vmatpush.msra.mxu0 0.0
        %358 = vmatpush.msra.mxu0 0.0
        %359 = vmatpush.msra.mxu0 0.0
        %360 = vmatpush.msra.mxu0 0.0
        %361 = vmatpush.msra.mxu0 0.0
        %362 = vmatpush.msra.mxu0 0.0
        %363 = vmatpush.msra.mxu0 0.0
        %364 = vmatpush.msra.mxu0 0.0
        %365 = vmatpush.msra.mxu0 0.0
        %366 = vmatpush.msra.mxu0 0.0
        %367 = vmatpush.msra.mxu0 0.0
        %368 = vmatpush.msra.mxu0 0.0
        %369 = vmatpush.msra.mxu0 %v347
        %370 = vmatpush.msra.mxu0 %v346
        %371 = vmatmul.f32.gmra.mxu0 %v350
        %v372 = vpop.f32.mrf.mxu0
        %v373 = vadd.f32 0.0, %v372
        %374 = vmatmul.f32.gmra.mxu0 %v353
        %v375 = vpop.f32.mrf.mxu0
        %v376 = vadd.f32 0.0, %v375
        %377 = vdwg.mxu0
        %vm378 = vcmask 523264
        %v380 = vsel %vm378, %v317, 0
        %v383 = vsel %vm378, %v319, 0
        %385 = vmatpush.msra.mxu0 %v335
        %386 = vmatpush.msra.mxu0 %v334
        %387 = vmatpush.msra.mxu0 %v333
        %388 = vmatpush.msra.mxu0 %v332
        %389 = vmatpush.msra.mxu0 %v331
        %390 = vmatpush.msra.mxu0 %v330
        %391 = vmatpush.msra.mxu0 %v329
        %392 = vmatpush.msra.mxu0 %v328
        %393 = vmatpush.msra.mxu0 %v327
        %394 = vmatpush.msra.mxu0 %v326
        %395 = vmatpush.msra.mxu0 %v325
        %396 = vmatpush.msra.mxu0 %v324
        %397 = vmatpush.msra.mxu0 %v323
        %398 = vmatpush.msra.mxu0 %v322
        %399 = vmatpush.msra.mxu0 %v321
        %400 = vmatpush.msra.mxu0 %v320
        %401 = vmatmul.f32.gmra.mxu0 %v316
        %v402 = vpop.f32.mrf.mxu0
        %v403 = vadd.f32 %v373, %v402
        %404 = vmatmul.f32.gmra.mxu0 %v318
        %v405 = vpop.f32.mrf.mxu0
        %v406 = vadd.f32 %v376, %v405
        %407 = vdwg.mxu0
        %408 = vmatpush.msra.mxu0 0.0
        %409 = vmatpush.msra.mxu0 0.0
        %410 = vmatpush.msra.mxu0 0.0
        %411 = vmatpush.msra.mxu0 0.0
        %412 = vmatpush.msra.mxu0 0.0
        %413 = vmatpush.msra.mxu0 0.0
        %414 = vmatpush.msra.mxu0 0.0
        %415 = vmatpush.msra.mxu0 0.0
        %416 = vmatpush.msra.mxu0 %v343
        %417 = vmatpush.msra.mxu0 %v342
        %418 = vmatpush.msra.mxu0 %v341
        %419 = vmatpush.msra.mxu0 %v340
        %420 = vmatpush.msra.mxu0 %v339
        %421 = vmatpush.msra.mxu0 %v338
        %422 = vmatpush.msra.mxu0 %v337
        %423 = vmatpush.msra.mxu0 %v336
        %424 = vmatmul.f32.gmra.mxu0 %v380
        %v425 = vpop.f32.mrf.mxu0
        %v426 = vadd.f32 %v403, %v425
        %427 = vmatmul.f32.gmra.mxu0 %v383
        %v428 = vpop.f32.mrf.mxu0
        %v429 = vadd.f32 %v406, %v428
        %430 = vdwg.mxu0
        %431 = vst [vmem:[%s312] sm:$0xff] %v426
        %432 = vst [vmem:[%s312 + $0x8] sm:$0xff] %v429
        %s433 = sand.u32 %s142, 1
        %s434 = scalar_lea.sflag [#allocation4], %s433
        %s435 = sand.u32 %s142, 1
        %s436 = smul.addr %s435, 16
        %s437 = scalar_lea.vmem [#allocation9], %s436
        // Predicated region
        $region53: #{tpu_custom_call.1} parent=35 // pred_check
          %p438 = pneg %p152
        $region54: #{tpu_custom_call.1} parent=35 // pred_check_branch
          %440 = sbr.rel (%p438) target = $region56
        $region55: #{tpu_custom_call.1} parent=35 // pred_region
          %s441 = smul.u32 2, %s27
          %443 = vsyncadd %s434, 0
          %s444 = smul.addr %s26, 2
          %s445 = sadd.s32 %s441, %s444
          %s446 = smul.addr %s445, 8
          %s447 = scalar_lea.hbm %s4, %s446
          %s448 = sshll.u32 %s437, 4
          %s449 = int_to_ptr.vmem [resolvable:$true] %s448
          %s450 = sshll.u32 %s447, 4
          %s451 = int_to_ptr.hbm [resolvable:$true] %s450
          %456 = dma.vmem_to_hbm [thread:$0]  %s449, 256, %s451, %s434, 128, 128, 8
        $region56: #{tpu_custom_call.1} parent=35 // pred_fallthru
          _
      $region36: #{tpu_custom_call.1} parent=5 // pred_fallthru
        _
      %p457 = scmp.le.s32.totalorder 2, %s17
      // Predicated region
      $region57: #{tpu_custom_call.1} parent=5 // pred_check
        %p458 = pneg %p457
      $region58: #{tpu_custom_call.1} parent=5 // pred_check_branch
        %460 = sbr.rel (%p458) target = $region60
      $region59: #{tpu_custom_call.1} parent=5 // pred_region
        %s461 = ssub.s32 %s17, 2
        // Predicated region
        $region61: #{tpu_custom_call.1} parent=59 // pred_check
          %p462 = pneg %p158
        $region62: #{tpu_custom_call.1} parent=59 // pred_check_branch
          %464 = sbr.rel (%p462) target = $region64
        $region63: #{tpu_custom_call.1} parent=59 // pred_region
          %s465 = sand.u32 %s143, 1
          %s466 = scalar_lea.sflag [#allocation4], %s465
          %s467 = sand.u32 %s143, 1
          %s468 = smul.addr %s467, 16
          %s469 = scalar_lea.vmem [#allocation9], %s468
          %471 = dma.done %s466, 256
        $region64: #{tpu_custom_call.1} parent=59 // pred_fallthru
          _
      $region60: #{tpu_custom_call.1} parent=5 // pred_fallthru
        _
    $region6: #{tpu_custom_call.1} parent=1 // loop_footer
      %s21 = sadd.s32 1, %s17
    $region7: #{tpu_custom_call.1} parent=1 // loop_footer_branch
      %16 = sbr.rel target = $region3
    $region8: #{tpu_custom_call.1} parent=1 // loop_exit
      _
    %472 = vsyncpa [#allocation3], 1
    %s473 = scalar_lea.sflag [#allocation3], 1
    %474 = vsyncpa %s473, 1
    %475 = vsyncpa [#allocation6], 1
    %476 = vsyncpa [#allocation4], 1
    %s477 = scalar_lea.sflag [#allocation4], 1
    %478 = vsyncpa %s477, 1

</llo_original>
